<compile_context>
chip_gen: v5e
topology: v5e:2x2
jax: 0.10.0
libtpu: 0.0.40
codegen_flags: <defaults>
</compile_context>

<pallas_src>
import functools

import numpy as np
import jax
import jax.numpy as jnp
from jax.experimental import pallas as pl
from jax.experimental.pallas import tpu as pltpu


# ----------------------------------------------------------------------------
# Pallas kernel: one tile of tree nodes (all at the same depth).
# ----------------------------------------------------------------------------
def _level_kernel(
    x_ref,       # (tile_m, in_dim)       f32  node inputs
    cc_ref,      # (n_max, tile_m, mem)   f32  child cell states (zero-padded)
    ch_ref,      # (n_max, tile_m, mem)   f32  child hidden states (zero-padded)
    invn_ref,    # (tile_m, 1)            f32  1 / max(num_children, 1)
    wx4_ref,     # (in_dim, 4*mem)        bf16 [W_ioux | W_fx]
    bx4_ref,     # (1, 4*mem)             f32  [b_ioux+b_iouh | b_fx+b_fh]
    wiouh_ref,   # (mem, 3*mem)           bf16
    wfh_ref,     # (mem, mem)             bf16
    c_ref,       # out (tile_m, mem)      f32
    h_ref,       # out (tile_m, mem)      f32
):
    m = c_ref.shape[-1]
    n_max = cc_ref.shape[0]

    x = x_ref[...].astype(jnp.bfloat16)            # (tm, in_dim)
    child_c = cc_ref[...]                          # (n_max, tm, m)
    child_h = ch_ref[...]                          # (n_max, tm, m)
    inv_n = invn_ref[...]                          # (tm, 1)

    # Fused x-path projection (both linear biases pre-folded on the host).
    xproj = (jnp.dot(x, wx4_ref[...], preferred_element_type=jnp.float32)
             + bx4_ref[...])                       # (tm, 4m)
    fx = xproj[:, 3 * m:4 * m]                     # (tm, m)

    # torch.mean(child_h, dim=0): padded child rows are zero, divide by true N.
    h_mean = (jnp.sum(child_h, axis=0) * inv_n).astype(jnp.bfloat16)     # (tm, m)

    iou = xproj[:, 0:3 * m] + jnp.dot(
        h_mean, wiouh_ref[...], preferred_element_type=jnp.float32)      # (tm, 3m)
    i = jax.nn.sigmoid(iou[:, 0:m])
    o = jax.nn.sigmoid(iou[:, m:2 * m])
    u = jnp.tanh(iou[:, 2 * m:3 * m])

    # Forget gates / cell contribution per child.  n_max (tree fan-out) is
    # small, so the loop is unrolled at trace time; padded children have
    # child_c == 0 and contribute nothing.
    wfh = wfh_ref[...]
    fc_sum = jnp.zeros_like(fx)
    for k in range(n_max):
        fh_k = jnp.dot(child_h[k].astype(jnp.bfloat16), wfh,
                       preferred_element_type=jnp.float32)                # (tm, m)
        f_k = jax.nn.sigmoid(fh_k + fx)
        fc_sum = fc_sum + f_k * child_c[k]

    c = i * u + fc_sum
    h = o * jnp.tanh(c)
    c_ref[...] = c
    h_ref[...] = h


# ----------------------------------------------------------------------------
# One jitted step per tree level: gather children, run kernel, scatter states.
# All levels of a tree share one shape signature -> compiled exactly once.
# ----------------------------------------------------------------------------
@functools.partial(jax.jit, static_argnames=("tile_m",))
def _level_step(c_all, h_all, inputs2d, x_rows, child_rows, inv_n, out_rows,
                params, tile_m):
    l_pad = x_rows.shape[0]
    n_max = child_rows.shape[0]
    mem = c_all.shape[1]
    in_dim = inputs2d.shape[1]

    x_lvl = jnp.take(inputs2d, x_rows, axis=0)        # (l_pad, in_dim)
    cc_lvl = jnp.take(c_all, child_rows, axis=0)      # (n_max, l_pad, mem)
    ch_lvl = jnp.take(h_all, child_rows, axis=0)      # (n_max, l_pad, mem)

    c_lvl, h_lvl = pl.pallas_call(
        _level_kernel,
        out_shape=(jax.ShapeDtypeStruct((l_pad, mem), jnp.float32),
                   jax.ShapeDtypeStruct((l_pad, mem), jnp.float32)),
        grid_spec=pltpu.PrefetchScalarGridSpec(
            num_scalar_prefetch=0,
            grid=(l_pad // tile_m,),
            in_specs=[
                pl.BlockSpec((tile_m, in_dim), lambda i: (i, 0)),
                pl.BlockSpec((n_max, tile_m, mem), lambda i: (0, i, 0)),
                pl.BlockSpec((n_max, tile_m, mem), lambda i: (0, i, 0)),
                pl.BlockSpec((tile_m, 1), lambda i: (i, 0)),
                # Weights: constant block index -> stay VMEM-resident over grid.
                pl.BlockSpec((in_dim, 4 * mem), lambda i: (0, 0)),
                pl.BlockSpec((1, 4 * mem), lambda i: (0, 0)),
                pl.BlockSpec((mem, 3 * mem), lambda i: (0, 0)),
                pl.BlockSpec((mem, mem), lambda i: (0, 0)),
            ],
            out_specs=[
                pl.BlockSpec((tile_m, mem), lambda i: (i, 0)),
                pl.BlockSpec((tile_m, mem), lambda i: (i, 0)),
            ],
        ),
        compiler_params=pltpu.CompilerParams(
            dimension_semantics=("parallel",)),
    )(x_lvl, cc_lvl, ch_lvl, inv_n,
      params["w_x4"], params["b_x4"], params["w_iouh"], params["w_fh"])

    # Scatter the level's results into the global state buffers.
    # Padded node slots target a dedicated dump row (harmless duplicates).
    c_all = c_all.at[out_rows].set(c_lvl)
    h_all = h_all.at[out_rows].set(h_lvl)
    return c_all, h_all


# ----------------------------------------------------------------------------
# Host-side tree + module wrapper.
# ----------------------------------------------------------------------------
class Tree:
    def __init__(self, idx, children=()):
        self.idx = idx
        self.children = list(children)
        self.num_children = len(self.children)
        self.state = None


class ChildSumTreeLSTMPallas:
    """Forward-pass-equivalent of the PyTorch ChildSumTreeLSTM (torch.mean over
    children), evaluated level-synchronously on TPU."""

    def __init__(self, in_dim, mem_dim, key, tile_m=8):
        # tile_m must be a multiple of 8; use 128 (v5e) / 256 (v6e, v7x) for
        # wide trees.
        self.in_dim = in_dim
        self.mem_dim = mem_dim
        self.tile_m = tile_m
        self.hidden_states = []

        def linear(k, fan_in, fan_out):
            # PyTorch nn.Linear default init: U(-1/sqrt(fan_in), 1/sqrt(fan_in))
            kw, kb = jax.random.split(k)
            bound = 1.0 / (fan_in ** 0.5)
            w = jax.random.uniform(kw, (fan_in, fan_out), jnp.float32, -bound, bound)
            b = jax.random.uniform(kb, (1, fan_out), jnp.float32, -bound, bound)
            return w, b

        k1, k2, k3, k4 = jax.random.split(key, 4)
        w_ioux, b_ioux = linear(k1, in_dim, 3 * mem_dim)
        w_iouh, b_iouh = linear(k2, mem_dim, 3 * mem_dim)
        w_fx, b_fx = linear(k3, in_dim, mem_dim)
        w_fh, b_fh = linear(k4, mem_dim, mem_dim)

        # Fused x-path weight + pre-folded biases; bf16 weights, f32 biases.
        self.params = dict(
            w_x4=jnp.concatenate([w_ioux, w_fx], axis=1).astype(jnp.bfloat16),
            b_x4=jnp.concatenate([b_ioux + b_iouh, b_fx + b_fh], axis=1),
            w_iouh=w_iouh.astype(jnp.bfloat16),
            w_fh=w_fh.astype(jnp.bfloat16),
        )

    def clear_states(self):
        self.hidden_states = []

    def get_states(self):
        return self.hidden_states

    def forward(self, tree, inputs):
        # TODO(synk): the tree topology is data-dependent host control flow;
        # the level schedule / post-order list is built in Python, all numerics
        # (gather, node update, scatter) run on device.
        inputs2d = jnp.reshape(inputs, (inputs.shape[0], -1))      # (seq, in_dim)

        # Post-order enumeration (== order the PyTorch module appends states).
        post = []

        def visit(node, depth):
            for ch in node.children:
                visit(ch, depth + 1)
            node._row = len(post)
            node._depth = depth
            post.append(node)

        visit(tree, 0)
        n_nodes = len(post)
        n_max = max(1, max(n.num_children for n in post))
        max_depth = max(n._depth for n in post)

        levels = [[] for _ in range(max_depth + 1)]
        for n in post:
            levels[n._depth].append(n)

        # Pad every level to one common width -> single compile for the tree.
        l_pad = -(-max(len(lv) for lv in levels) // self.tile_m) * self.tile_m

        zero_row = n_nodes        # always-zero child row (leaves / padding)
        dump_row = n_nodes + 1    # scatter target for padded node slots

        c_all = jnp.zeros((n_nodes + 2, self.mem_dim), jnp.float32)
        h_all = jnp.zeros((n_nodes + 2, self.mem_dim), jnp.float32)

        for depth in range(max_depth, -1, -1):      # deepest level first
            lv = levels[depth]
            x_rows = np.zeros((l_pad,), np.int32)
            child_rows = np.full((n_max, l_pad), zero_row, np.int32)
            inv_n = np.ones((l_pad, 1), np.float32)
            out_rows = np.full((l_pad,), dump_row, np.int32)
            for j, node in enumerate(lv):
                x_rows[j] = node.idx
                out_rows[j] = node._row
                inv_n[j, 0] = 1.0 / max(node.num_children, 1)
                for k, ch in enumerate(node.children):
                    child_rows[k, j] = ch._row
            c_all, h_all = _level_step(
                c_all, h_all, inputs2d,
                jnp.asarray(x_rows), jnp.asarray(child_rows),
                jnp.asarray(inv_n), jnp.asarray(out_rows),
                self.params, self.tile_m)

        # API parity with the PyTorch module (cheap for small trees; for large
        # trees keep the packed buffers instead of per-node slices).
        for n in post:
            n.state = (c_all[n._row:n._row + 1], h_all[n._row:n._row + 1])
            self.hidden_states.append(n.state[1])
        return tree.state


# ----------------------------------------------------------------------------
# Pure-JAX per-node reference (same fused params) for a correctness cross-check.
# ----------------------------------------------------------------------------
def _reference_node(params, x, child_c, child_h, inv_n):
    m = child_c.shape[1]
    bf = jnp.bfloat16
    xproj = (jnp.dot(x.astype(bf), params["w_x4"],
                     preferred_element_type=jnp.float32) + params["b_x4"])
    fx = xproj[:, 3 * m:]
    h_mean = (jnp.sum(child_h, axis=0, keepdims=True) * inv_n).astype(bf)
    iou = xproj[:, :3 * m] + jnp.dot(h_mean, params["w_iouh"],
                                     preferred_element_type=jnp.float32)
    i = jax.nn.sigmoid(iou[:, :m])
    o = jax.nn.sigmoid(iou[:, m:2 * m])
    u = jnp.tanh(iou[:, 2 * m:])
    fh = jnp.dot(child_h.astype(bf), params["w_fh"],
                 preferred_element_type=jnp.float32)
    f = jax.nn.sigmoid(fh + fx)
    c = i * u + jnp.sum(f * child_c, axis=0, keepdims=True)
    h = o * jnp.tanh(c)
    return c, h


def _reference_forward(tree, inputs2d, params, mem_dim):
    def rec(node):
        if node.num_children == 0:
            cc = jnp.zeros((1, mem_dim), jnp.float32)
            ch = jnp.zeros((1, mem_dim), jnp.float32)
            inv = 1.0
        else:
            pairs = [rec(c) for c in node.children]
            cc = jnp.concatenate([p[0] for p in pairs], axis=0)
            ch = jnp.concatenate([p[1] for p in pairs], axis=0)
            inv = 1.0 / node.num_children
        return _reference_node(params, inputs2d[node.idx:node.idx + 1], cc, ch, inv)
    return rec(tree)


# ----------------------------------------------------------------------------
# Demo
# ----------------------------------------------------------------------------
if __name__ == "__main__":
    IN_DIM = 64     # token embedding size
    MEM_DIM = 128   # multiple of 128 so gate slices are lane-aligned
    SEQ = 8

    key = jax.random.PRNGKey(0)
    k_params, k_inputs = jax.random.split(key)

    model = ChildSumTreeLSTMPallas(IN_DIM, MEM_DIM, k_params, tile_m=8)

    # inputs: (seq_len, 1, in_dim), matching the PyTorch usage inputs[tree.idx].
    inputs = jax.random.normal(k_inputs, (SEQ, 1, IN_DIM), jnp.float32)

    # Small dependency tree over token indices 0..6.
    #        0
    #      / | \
    #     1  4  6
    #    / \  \
    #   2   3  5
    tree = Tree(0, [
        Tree(1, [Tree(2), Tree(3)]),
        Tree(4, [Tree(5)]),
        Tree(6),
    ])

    c_root, h_root = model.forward(tree, inputs)
    jax.block_until_ready((c_root, h_root))
    jax.block_until_ready(model.get_states())

    assert c_root.shape == (1, MEM_DIM) and h_root.shape == (1, MEM_DIM)
    assert len(model.get_states()) == 7

    # Cross-check the batched/padded kernel against a per-node JAX recursion.
    c_chk, h_chk = _reference_forward(
        tree, inputs.reshape(SEQ, IN_DIM), model.params, MEM_DIM)
    assert jnp.allclose(c_root, c_chk, atol=2e-2, rtol=2e-2)
    assert jnp.allclose(h_root, h_chk, atol=2e-2, rtol=2e-2)

    print("KERNEL_OK")
</pallas_src>

<mosaic_0001>
module attributes {stable_mosaic.version = 11 : i64} {
  func.func @_level_kernel(%arg0: i32, %arg1: memref<8x64xf32, #tpu.memory_space<vmem>>, %arg2: memref<3x8x128xf32, #tpu.memory_space<vmem>>, %arg3: memref<3x8x128xf32, #tpu.memory_space<vmem>>, %arg4: memref<8x1xf32, #tpu.memory_space<vmem>>, %arg5: memref<64x512xbf16, #tpu.memory_space<vmem>>, %arg6: memref<1x512xf32, #tpu.memory_space<vmem>>, %arg7: memref<128x384xbf16, #tpu.memory_space<vmem>>, %arg8: memref<128x128xbf16, #tpu.memory_space<vmem>>, %arg9: memref<8x128xf32, #tpu.memory_space<vmem>>, %arg10: memref<8x128xf32, #tpu.memory_space<vmem>>) attributes {dimension_semantics = [#tpu.dimension_semantics<parallel>], iteration_bounds = array<i64: 1>, scalar_prefetch = 0 : i64, scratch_operands = 0 : i64, tpu.core_type = #tpu.core_type<tc>, window_params = [{transform_indices = @transform_0, window_bounds = array<i64: 8, 64>}, {transform_indices = @transform_1, window_bounds = array<i64: 3, 8, 128>}, {transform_indices = @transform_2, window_bounds = array<i64: 3, 8, 128>}, {transform_indices = @transform_3, window_bounds = array<i64: 8, 1>}, {pipeline_mode = #tpu.pipeline_mode<synchronous>, transform_indices = @transform_4, window_bounds = array<i64: 64, 512>}, {pipeline_mode = #tpu.pipeline_mode<synchronous>, transform_indices = @transform_5, window_bounds = array<i64: 1, 512>}, {pipeline_mode = #tpu.pipeline_mode<synchronous>, transform_indices = @transform_6, window_bounds = array<i64: 128, 384>}, {pipeline_mode = #tpu.pipeline_mode<synchronous>, transform_indices = @transform_7, window_bounds = array<i64: 128, 128>}, {transform_indices = @transform_8, window_bounds = array<i64: 8, 128>}, {transform_indices = @transform_9, window_bounds = array<i64: 8, 128>}]} {
    %c0 = arith.constant 0 : index
    %c0_0 = arith.constant 0 : index
    %0 = vector.load %arg1[%c0, %c0_0] : memref<8x64xf32, #tpu.memory_space<vmem>>, vector<8x64xf32>
    %1 = arith.truncf %0 : vector<8x64xf32> to vector<8x64xbf16>
    %c0_1 = arith.constant 0 : index
    %c0_2 = arith.constant 0 : index
    %c0_3 = arith.constant 0 : index
    %2 = vector.load %arg2[%c0_1, %c0_2, %c0_3] : memref<3x8x128xf32, #tpu.memory_space<vmem>>, vector<3x8x128xf32>
    %c0_4 = arith.constant 0 : index
    %c0_5 = arith.constant 0 : index
    %c0_6 = arith.constant 0 : index
    %3 = vector.load %arg3[%c0_4, %c0_5, %c0_6] : memref<3x8x128xf32, #tpu.memory_space<vmem>>, vector<3x8x128xf32>
    %c0_7 = arith.constant 0 : index
    %c0_8 = arith.constant 0 : index
    %4 = vector.load %arg4[%c0_7, %c0_8] : memref<8x1xf32, #tpu.memory_space<vmem>>, vector<8x1xf32>
    %c0_9 = arith.constant 0 : index
    %c0_10 = arith.constant 0 : index
    %5 = vector.load %arg5[%c0_9, %c0_10] : memref<64x512xbf16, #tpu.memory_space<vmem>>, vector<64x512xbf16>
    %cst = arith.constant dense<0.000000e+00> : vector<8x512xf32>
    %6 = tpu.matmul %1, %5, %cst {dimension_numbers = #tpu.dot_dimension_numbers<[1], [0], [0], [1], [0, 0, 1, 1], [], []>} : vector<8x64xbf16>, vector<64x512xbf16>, vector<8x512xf32> -> vector<8x512xf32>
    %c0_11 = arith.constant 0 : index
    %c0_12 = arith.constant 0 : index
    %7 = vector.load %arg6[%c0_11, %c0_12] : memref<1x512xf32, #tpu.memory_space<vmem>>, vector<1x512xf32>
    %8 = vector.broadcast %7 : vector<1x512xf32> to vector<8x512xf32>
    %9 = arith.addf %6, %8 : vector<8x512xf32>
    %10 = vector.extract_strided_slice %9 {offsets = [0, 384], sizes = [8, 128], strides = [1, 1]} : vector<8x512xf32> to vector<8x128xf32>
    %cst_13 = arith.constant dense<0.000000e+00> : vector<8x128xf32>
    %11 = vector.multi_reduction <add>, %3, %cst_13 [0] : vector<3x8x128xf32> to vector<8x128xf32>
    %12 = vector.broadcast %4 : vector<8x1xf32> to vector<8x128xf32>
    %13 = arith.mulf %11, %12 : vector<8x128xf32>
    %14 = arith.truncf %13 : vector<8x128xf32> to vector<8x128xbf16>
    %15 = vector.extract_strided_slice %9 {offsets = [0, 0], sizes = [8, 384], strides = [1, 1]} : vector<8x512xf32> to vector<8x384xf32>
    %c0_14 = arith.constant 0 : index
    %c0_15 = arith.constant 0 : index
    %16 = vector.load %arg7[%c0_14, %c0_15] : memref<128x384xbf16, #tpu.memory_space<vmem>>, vector<128x384xbf16>
    %cst_16 = arith.constant dense<0.000000e+00> : vector<8x384xf32>
    %17 = tpu.matmul %14, %16, %cst_16 {dimension_numbers = #tpu.dot_dimension_numbers<[1], [0], [0], [1], [0, 0, 1, 1], [], []>} : vector<8x128xbf16>, vector<128x384xbf16>, vector<8x384xf32> -> vector<8x384xf32>
    %18 = arith.addf %15, %17 : vector<8x384xf32>
    %19 = vector.extract_strided_slice %18 {offsets = [0, 0], sizes = [8, 128], strides = [1, 1]} : vector<8x384xf32> to vector<8x128xf32>
    %20 = arith.negf %19 : vector<8x128xf32>
    %21 = math.exp %20 : vector<8x128xf32>
    %cst_17 = arith.constant 1.000000e+00 : f32
    %22 = vector.broadcast %cst_17 : f32 to vector<8x128xf32>
    %23 = arith.addf %22, %21 : vector<8x128xf32>
    %24 = arith.divf %22, %23 : vector<8x128xf32>
    %25 = vector.extract_strided_slice %18 {offsets = [0, 128], sizes = [8, 128], strides = [1, 1]} : vector<8x384xf32> to vector<8x128xf32>
    %26 = arith.negf %25 : vector<8x128xf32>
    %27 = math.exp %26 : vector<8x128xf32>
    %cst_18 = arith.constant 1.000000e+00 : f32
    %28 = vector.broadcast %cst_18 : f32 to vector<8x128xf32>
    %29 = arith.addf %28, %27 : vector<8x128xf32>
    %30 = arith.divf %28, %29 : vector<8x128xf32>
    %31 = vector.extract_strided_slice %18 {offsets = [0, 256], sizes = [8, 128], strides = [1, 1]} : vector<8x384xf32> to vector<8x128xf32>
    %32 = math.tanh %31 : vector<8x128xf32>
    %c0_19 = arith.constant 0 : index
    %c0_20 = arith.constant 0 : index
    %33 = vector.load %arg8[%c0_19, %c0_20] : memref<128x128xbf16, #tpu.memory_space<vmem>>, vector<128x128xbf16>
    %cst_21 = arith.constant 0.000000e+00 : f32
    %34 = vector.broadcast %cst_21 : f32 to vector<8x128xf32>
    %35 = vector.extract_strided_slice %3 {offsets = [0, 0, 0], sizes = [1, 8, 128], strides = [1, 1, 1]} : vector<3x8x128xf32> to vector<1x8x128xf32>
    %36 = vector.shape_cast %35 : vector<1x8x128xf32> to vector<8x128xf32>
    %37 = arith.truncf %36 : vector<8x128xf32> to vector<8x128xbf16>
    %cst_22 = arith.constant dense<0.000000e+00> : vector<8x128xf32>
    %38 = tpu.matmul %37, %33, %cst_22 {dimension_numbers = #tpu.dot_dimension_numbers<[1], [0], [0], [1], [0, 0, 1, 1], [], []>} : vector<8x128xbf16>, vector<128x128xbf16>, vector<8x128xf32> -> vector<8x128xf32>
    %39 = arith.addf %38, %10 : vector<8x128xf32>
    %40 = arith.negf %39 : vector<8x128xf32>
    %41 = math.exp %40 : vector<8x128xf32>
    %cst_23 = arith.constant 1.000000e+00 : f32
    %42 = vector.broadcast %cst_23 : f32 to vector<8x128xf32>
    %43 = arith.addf %42, %41 : vector<8x128xf32>
    %44 = arith.divf %42, %43 : vector<8x128xf32>
    %45 = vector.extract_strided_slice %2 {offsets = [0, 0, 0], sizes = [1, 8, 128], strides = [1, 1, 1]} : vector<3x8x128xf32> to vector<1x8x128xf32>
    %46 = vector.shape_cast %45 : vector<1x8x128xf32> to vector<8x128xf32>
    %47 = arith.mulf %44, %46 : vector<8x128xf32>
    %48 = arith.addf %34, %47 : vector<8x128xf32>
    %49 = vector.extract_strided_slice %3 {offsets = [1, 0, 0], sizes = [1, 8, 128], strides = [1, 1, 1]} : vector<3x8x128xf32> to vector<1x8x128xf32>
    %50 = vector.shape_cast %49 : vector<1x8x128xf32> to vector<8x128xf32>
    %51 = arith.truncf %50 : vector<8x128xf32> to vector<8x128xbf16>
    %cst_24 = arith.constant dense<0.000000e+00> : vector<8x128xf32>
    %52 = tpu.matmul %51, %33, %cst_24 {dimension_numbers = #tpu.dot_dimension_numbers<[1], [0], [0], [1], [0, 0, 1, 1], [], []>} : vector<8x128xbf16>, vector<128x128xbf16>, vector<8x128xf32> -> vector<8x128xf32>
    %53 = arith.addf %52, %10 : vector<8x128xf32>
    %54 = arith.negf %53 : vector<8x128xf32>
    %55 = math.exp %54 : vector<8x128xf32>
    %cst_25 = arith.constant 1.000000e+00 : f32
    %56 = vector.broadcast %cst_25 : f32 to vector<8x128xf32>
    %57 = arith.addf %56, %55 : vector<8x128xf32>
    %58 = arith.divf %56, %57 : vector<8x128xf32>
    %59 = vector.extract_strided_slice %2 {offsets = [1, 0, 0], sizes = [1, 8, 128], strides = [1, 1, 1]} : vector<3x8x128xf32> to vector<1x8x128xf32>
    %60 = vector.shape_cast %59 : vector<1x8x128xf32> to vector<8x128xf32>
    %61 = arith.mulf %58, %60 : vector<8x128xf32>
    %62 = arith.addf %48, %61 : vector<8x128xf32>
    %63 = vector.extract_strided_slice %3 {offsets = [2, 0, 0], sizes = [1, 8, 128], strides = [1, 1, 1]} : vector<3x8x128xf32> to vector<1x8x128xf32>
    %64 = vector.shape_cast %63 : vector<1x8x128xf32> to vector<8x128xf32>
    %65 = arith.truncf %64 : vector<8x128xf32> to vector<8x128xbf16>
    %cst_26 = arith.constant dense<0.000000e+00> : vector<8x128xf32>
    %66 = tpu.matmul %65, %33, %cst_26 {dimension_numbers = #tpu.dot_dimension_numbers<[1], [0], [0], [1], [0, 0, 1, 1], [], []>} : vector<8x128xbf16>, vector<128x128xbf16>, vector<8x128xf32> -> vector<8x128xf32>
    %67 = arith.addf %66, %10 : vector<8x128xf32>
    %68 = arith.negf %67 : vector<8x128xf32>
    %69 = math.exp %68 : vector<8x128xf32>
    %cst_27 = arith.constant 1.000000e+00 : f32
    %70 = vector.broadcast %cst_27 : f32 to vector<8x128xf32>
    %71 = arith.addf %70, %69 : vector<8x128xf32>
    %72 = arith.divf %70, %71 : vector<8x128xf32>
    %73 = vector.extract_strided_slice %2 {offsets = [2, 0, 0], sizes = [1, 8, 128], strides = [1, 1, 1]} : vector<3x8x128xf32> to vector<1x8x128xf32>
    %74 = vector.shape_cast %73 : vector<1x8x128xf32> to vector<8x128xf32>
    %75 = arith.mulf %72, %74 : vector<8x128xf32>
    %76 = arith.addf %62, %75 : vector<8x128xf32>
    %77 = arith.mulf %24, %32 : vector<8x128xf32>
    %78 = arith.addf %77, %76 : vector<8x128xf32>
    %79 = math.tanh %78 : vector<8x128xf32>
    %80 = arith.mulf %30, %79 : vector<8x128xf32>
    %c0_28 = arith.constant 0 : index
    %c0_29 = arith.constant 0 : index
    %81 = vector.load %arg9[%c0_28, %c0_29] : memref<8x128xf32, #tpu.memory_space<vmem>>, vector<8x128xf32>
    tpu.vector_store %arg9[%c0_28, %c0_29], %78 {strides = array<i32>} : memref<8x128xf32, #tpu.memory_space<vmem>>, vector<8x128xf32>,
    %c0_30 = arith.constant 0 : index
    %c0_31 = arith.constant 0 : index
    %82 = vector.load %arg10[%c0_30, %c0_31] : memref<8x128xf32, #tpu.memory_space<vmem>>, vector<8x128xf32>
    tpu.vector_store %arg10[%c0_30, %c0_31], %80 {strides = array<i32>} : memref<8x128xf32, #tpu.memory_space<vmem>>, vector<8x128xf32>,
    return
  }
  func.func @transform_0(%arg0: i32) -> (i32, i32) {
    %c0_i32 = arith.constant 0 : i32
    %c0_i32_0 = arith.constant 0 : i32
    return %arg0, %c0_i32 : i32, i32
  }
  func.func @transform_1(%arg0: i32) -> (i32, i32, i32) {
    %c0_i32 = arith.constant 0 : i32
    %c0_i32_0 = arith.constant 0 : i32
    %c0_i32_1 = arith.constant 0 : i32
    return %c0_i32, %arg0, %c0_i32_0 : i32, i32, i32
  }
  func.func @transform_2(%arg0: i32) -> (i32, i32, i32) {
    %c0_i32 = arith.constant 0 : i32
    %c0_i32_0 = arith.constant 0 : i32
    %c0_i32_1 = arith.constant 0 : i32
    return %c0_i32, %arg0, %c0_i32_0 : i32, i32, i32
  }
  func.func @transform_3(%arg0: i32) -> (i32, i32) {
    %c0_i32 = arith.constant 0 : i32
    %c0_i32_0 = arith.constant 0 : i32
    return %arg0, %c0_i32 : i32, i32
  }
  func.func @transform_4(%arg0: i32) -> (i32, i32) {
    %c0_i32 = arith.constant 0 : i32
    %c0_i32_0 = arith.constant 0 : i32
    %c0_i32_1 = arith.constant 0 : i32
    return %c0_i32, %c0_i32_0 : i32, i32
  }
  func.func @transform_5(%arg0: i32) -> (i32, i32) {
    %c0_i32 = arith.constant 0 : i32
    %c0_i32_0 = arith.constant 0 : i32
    %c0_i32_1 = arith.constant 0 : i32
    return %c0_i32, %c0_i32_0 : i32, i32
  }
  func.func @transform_6(%arg0: i32) -> (i32, i32) {
    %c0_i32 = arith.constant 0 : i32
    %c0_i32_0 = arith.constant 0 : i32
    %c0_i32_1 = arith.constant 0 : i32
    return %c0_i32, %c0_i32_0 : i32, i32
  }
  func.func @transform_7(%arg0: i32) -> (i32, i32) {
    %c0_i32 = arith.constant 0 : i32
    %c0_i32_0 = arith.constant 0 : i32
    %c0_i32_1 = arith.constant 0 : i32
    return %c0_i32, %c0_i32_0 : i32, i32
  }
  func.func @transform_8(%arg0: i32) -> (i32, i32) {
    %c0_i32 = arith.constant 0 : i32
    %c0_i32_0 = arith.constant 0 : i32
    return %arg0, %c0_i32 : i32, i32
  }
  func.func @transform_9(%arg0: i32) -> (i32, i32) {
    %c0_i32 = arith.constant 0 : i32
    %c0_i32_0 = arith.constant 0 : i32
    return %arg0, %c0_i32 : i32, i32
  }
}

</mosaic_0001>

<llo_original>
// kernel: _level_step.1
$region0: #{_level_step.1}
  #allocation0 [shape = 'u32[]', space=smem, size = 0x4, offset = 0x4, fixed_abs, tag = 'smem constant byte address 0x4 - core index']
  #allocation1 [shape = 'u32[72,128]{1,0:T(1,128)}', space=vmem, size = 0x9000, scoped, tag = 'internal scratch']
  %s0 = inlined_call_operand.vmem [shape: f32[8,64], index: 0, kind: input, shape index: {}]
  %s1 = inlined_call_operand.vmem [shape: f32[3,8,128], index: 1, kind: input, shape index: {}]
  %s2 = inlined_call_operand.vmem [shape: f32[3,8,128], index: 2, kind: input, shape index: {}]
  %s3 = inlined_call_operand.vmem [shape: f32[8,1], index: 3, kind: input, shape index: {}]
  %s4 = inlined_call_operand.vmem [shape: bf16[64,512], index: 4, kind: input, shape index: {}]
  %s5 = inlined_call_operand.vmem [shape: f32[1,512], index: 5, kind: input, shape index: {}]
  %s6 = inlined_call_operand.vmem [shape: bf16[128,384], index: 6, kind: input, shape index: {}]
  %s7 = inlined_call_operand.vmem [shape: bf16[128,128], index: 7, kind: input, shape index: {}]
  %s8 = inlined_call_operand.vmem [shape: f32[8,128], index: 8, kind: output, shape index: {0}]
  %s9 = inlined_call_operand.vmem [shape: f32[8,128], index: 9, kind: output, shape index: {1}]
  %10 = xla_tuple %s8, %s9
  %s11 = sld [smem:[#allocation0]]
  $region50: #{_level_step.1} parent=0
    _
  %s13 = ssub.s32 1, %s11
  %s14 = scalar_select 0, %s13, %s11
  // Predicated region
  $region2: #{_level_step.1} parent=0 // pred_check
    _
  $region3: #{_level_step.1} parent=0 // pred_check_branch
    %16 = sbr.rel (0) target = $region5
  $region4: #{_level_step.1} parent=0 // pred_region
    _
  $region5: #{_level_step.1} parent=0 // pred_fallthru
    _
  // Predicated region
  $region6: #{_level_step.1} parent=0 // pred_check
    _
  $region7: #{_level_step.1} parent=0 // pred_check_branch
    %18 = sbr.rel (0) target = $region9
  $region8: #{_level_step.1} parent=0 // pred_region
    _
  $region9: #{_level_step.1} parent=0 // pred_fallthru
    _
  // Predicated region
  $region10: #{_level_step.1} parent=0 // pred_check
    _
  $region11: #{_level_step.1} parent=0 // pred_check_branch
    %20 = sbr.rel (0) target = $region13
  $region12: #{_level_step.1} parent=0 // pred_region
    _
  $region13: #{_level_step.1} parent=0 // pred_fallthru
    _
  // Predicated region
  $region14: #{_level_step.1} parent=0 // pred_check
    _
  $region15: #{_level_step.1} parent=0 // pred_check_branch
    %22 = sbr.rel (0) target = $region17
  $region16: #{_level_step.1} parent=0 // pred_region
    _
  $region17: #{_level_step.1} parent=0 // pred_fallthru
    _
  // Predicated region
  $region18: #{_level_step.1} parent=0 // pred_check
    _
  $region19: #{_level_step.1} parent=0 // pred_check_branch
    %24 = sbr.rel (0) target = $region21
  $region20: #{_level_step.1} parent=0 // pred_region
    _
  $region21: #{_level_step.1} parent=0 // pred_fallthru
    _
  // Predicated region
  $region22: #{_level_step.1} parent=0 // pred_check
    _
  $region23: #{_level_step.1} parent=0 // pred_check_branch
    %26 = sbr.rel (0) target = $region25
  $region24: #{_level_step.1} parent=0 // pred_region
    _
  $region25: #{_level_step.1} parent=0 // pred_fallthru
    _
  // Predicated region
  $region26: #{_level_step.1} parent=0 // pred_check
    _
  $region27: #{_level_step.1} parent=0 // pred_check_branch
    %28 = sbr.rel (0) target = $region29
  $region28: #{_level_step.1} parent=0 // pred_region
    _
  $region29: #{_level_step.1} parent=0 // pred_fallthru
    _
  // Predicated region
  $region30: #{_level_step.1} parent=0 // pred_check
    _
  $region31: #{_level_step.1} parent=0 // pred_check_branch
    %30 = sbr.rel (0) target = $region33
  $region32: #{_level_step.1} parent=0 // pred_region
    _
  $region33: #{_level_step.1} parent=0 // pred_fallthru
    _
  %v32 = vld [vmem:[%s0] sm:$0xff]
  %v33 = vpack.c.bf16 %v32, %v32
  %v34 = vld [vmem:[%s1] sm:$0xff]
  %v35 = vld [vmem:[%s1 + $0x8] sm:$0xff]
  %v36 = vld [vmem:[%s1 + $0x10] sm:$0xff]
  %v37 = vld [vmem:[%s2] sm:$0xff]
  %v38 = vld [vmem:[%s2 + $0x8] sm:$0xff]
  %v39 = vld [vmem:[%s2 + $0x10] sm:$0xff]
  %v40 = vld [vmem:[%s3] sm:$0xff]
  %v41 = vld [vmem:[%s4] sm:$0xff]
  %v42 = vld [vmem:[%s4 + $0x8] sm:$0xff]
  %v43 = vld [vmem:[%s4 + $0x10] sm:$0xff]
  %v44 = vld [vmem:[%s4 + $0x18] sm:$0xff]
  %v45 = vld [vmem:[%s4 + $0x20] sm:$0xff]
  %v46 = vld [vmem:[%s4 + $0x28] sm:$0xff]
  %v47 = vld [vmem:[%s4 + $0x30] sm:$0xff]
  %v48 = vld [vmem:[%s4 + $0x38] sm:$0xff]
  %v49 = vld [vmem:[%s4 + $0x40] sm:$0xff]
  %v50 = vld [vmem:[%s4 + $0x48] sm:$0xff]
  %v51 = vld [vmem:[%s4 + $0x50] sm:$0xff]
  %v52 = vld [vmem:[%s4 + $0x58] sm:$0xff]
  %v53 = vld [vmem:[%s4 + $0x60] sm:$0xff]
  %v54 = vld [vmem:[%s4 + $0x68] sm:$0xff]
  %v55 = vld [vmem:[%s4 + $0x70] sm:$0xff]
  %v56 = vld [vmem:[%s4 + $0x78] sm:$0xff]
  %v57 = vld [vmem:[%s5] sm:$0xf]
  %v59 = vperm.slane %v57, 0
  %v60 = vperm.slane %v57, 1
  %v61 = vperm.slane %v57, 2
  %v62 = vperm.slane %v57, 3
  %v83 = vunpack.c.l.b16 %v41
  %v84 = vunpack.c.h.b16 %v41
  %v85 = vunpack.c.l.b16 %v42
  %v86 = vunpack.c.h.b16 %v42
  %v87 = vunpack.c.l.b16 %v43
  %v88 = vunpack.c.h.b16 %v43
  %v89 = vunpack.c.l.b16 %v44
  %v90 = vunpack.c.h.b16 %v44
  %v91 = vunpack.c.l.b16 %v45
  %v92 = vunpack.c.h.b16 %v45
  %v93 = vunpack.c.l.b16 %v46
  %v94 = vunpack.c.h.b16 %v46
  %v95 = vunpack.c.l.b16 %v47
  %v96 = vunpack.c.h.b16 %v47
  %v97 = vunpack.c.l.b16 %v48
  %v98 = vunpack.c.h.b16 %v48
  %v99 = vunpack.c.l.b16 %v49
  %v100 = vunpack.c.h.b16 %v49
  %v101 = vunpack.c.l.b16 %v50
  %v102 = vunpack.c.h.b16 %v50
  %v103 = vunpack.c.l.b16 %v51
  %v104 = vunpack.c.h.b16 %v51
  %v105 = vunpack.c.l.b16 %v52
  %v106 = vunpack.c.h.b16 %v52
  %v107 = vunpack.c.l.b16 %v53
  %v108 = vunpack.c.h.b16 %v53
  %v109 = vunpack.c.l.b16 %v54
  %v110 = vunpack.c.h.b16 %v54
  %v111 = vunpack.c.l.b16 %v55
  %v112 = vunpack.c.h.b16 %v55
  %v113 = vunpack.c.l.b16 %v56
  %v114 = vunpack.c.h.b16 %v56
  %v115 = vpack.c.b16 %v87, %v83
  %v116 = vpack.c.b16 %v88, %v84
  %v117 = vpack.c.b16 %v89, %v85
  %v118 = vpack.c.b16 %v90, %v86
  %v119 = vpack.c.b16 %v95, %v91
  %v120 = vpack.c.b16 %v96, %v92
  %v121 = vpack.c.b16 %v97, %v93
  %v122 = vpack.c.b16 %v98, %v94
  %v123 = vpack.c.b16 %v103, %v99
  %v124 = vpack.c.b16 %v104, %v100
  %v125 = vpack.c.b16 %v105, %v101
  %v126 = vpack.c.b16 %v106, %v102
  %v127 = vpack.c.b16 %v111, %v107
  %v128 = vpack.c.b16 %v112, %v108
  %v129 = vpack.c.b16 %v113, %v109
  %v130 = vpack.c.b16 %v114, %v110
  %vm147 = vcmask 523264
  %v149 = vsel %vm147, %v33, 0
  %151 = vmatpush.bf16.msra.mxu0 0
  %152 = vmatpush.bf16.msra.mxu0 0
  %153 = vmatpush.bf16.msra.mxu0 0
  %154 = vmatpush.bf16.msra.mxu0 0
  %155 = vmatpush.bf16.msra.mxu0 %v127
  %156 = vmatpush.bf16.msra.mxu0 %v123
  %157 = vmatpush.bf16.msra.mxu0 %v119
  %158 = vmatpush.bf16.msra.mxu0 %v115
  %159 = vmatmul.bf16.gmra.mxu0 %v149
  %v160 = vpop.f32.mrf.mxu0
  %v161 = vadd.f32 %v59, %v160
  %v162 = vpop.f32.mrf.mxu0
  %163 = vdwg.mxu0
  %164 = vmatpush.bf16.msra.mxu0 0
  %165 = vmatpush.bf16.msra.mxu0 0
  %166 = vmatpush.bf16.msra.mxu0 0
  %167 = vmatpush.bf16.msra.mxu0 0
  %168 = vmatpush.bf16.msra.mxu0 %v128
  %169 = vmatpush.bf16.msra.mxu0 %v124
  %170 = vmatpush.bf16.msra.mxu0 %v120
  %171 = vmatpush.bf16.msra.mxu0 %v116
  %172 = vmatmul.bf16.gmra.mxu0 %v149
  %v173 = vpop.f32.mrf.mxu0
  %v174 = vadd.f32 %v60, %v173
  %v175 = vpop.f32.mrf.mxu0
  %176 = vdwg.mxu0
  %177 = vmatpush.bf16.msra.mxu0 0
  %178 = vmatpush.bf16.msra.mxu0 0
  %179 = vmatpush.bf16.msra.mxu0 0
  %180 = vmatpush.bf16.msra.mxu0 0
  %181 = vmatpush.bf16.msra.mxu0 %v129
  %182 = vmatpush.bf16.msra.mxu0 %v125
  %183 = vmatpush.bf16.msra.mxu0 %v121
  %184 = vmatpush.bf16.msra.mxu0 %v117
  %185 = vmatmul.bf16.gmra.mxu0 %v149
  %v186 = vpop.f32.mrf.mxu0
  %v187 = vadd.f32 %v61, %v186
  %v188 = vpop.f32.mrf.mxu0
  %189 = vdwg.mxu0
  %190 = vmatpush.bf16.msra.mxu0 0
  %191 = vmatpush.bf16.msra.mxu0 0
  %192 = vmatpush.bf16.msra.mxu0 0
  %193 = vmatpush.bf16.msra.mxu0 0
  %194 = vmatpush.bf16.msra.mxu0 %v130
  %195 = vmatpush.bf16.msra.mxu0 %v126
  %196 = vmatpush.bf16.msra.mxu0 %v122
  %197 = vmatpush.bf16.msra.mxu0 %v118
  %198 = vmatmul.bf16.gmra.mxu0 %v149
  %v199 = vpop.f32.mrf.mxu0
  %v200 = vadd.f32 %v62, %v199
  %v201 = vpop.f32.mrf.mxu0
  %202 = vdwg.mxu0
  %v203 = vadd.f32 %v37, %v38
  %v204 = vadd.f32 %v203, %v39
  %206 = vset.pattern.permute.xlu0 0
  %207 = vperm.xlu0 %206, %v40
  %v208 = vpop.permute.xlu0 %207
  %v210 = vmul.f32 %v204, %v208
  %v211 = vpack.c.bf16 %v210, %v210
  %v212 = vld [vmem:[%s6] sm:$0xff]
  %v213 = vld [vmem:[%s6 + $0x8] sm:$0xf]
  %v214 = vld [vmem:[%s6 + $0xc] sm:$0xff]
  %v215 = vld [vmem:[%s6 + $0x14] sm:$0xf]
  %v216 = vld [vmem:[%s6 + $0x18] sm:$0xff]
  %v217 = vld [vmem:[%s6 + $0x20] sm:$0xf]
  %v218 = vld [vmem:[%s6 + $0x24] sm:$0xff]
  %v219 = vld [vmem:[%s6 + $0x2c] sm:$0xf]
  %v220 = vld [vmem:[%s6 + $0x30] sm:$0xff]
  %v221 = vld [vmem:[%s6 + $0x38] sm:$0xf]
  %v222 = vld [vmem:[%s6 + $0x3c] sm:$0xff]
  %v223 = vld [vmem:[%s6 + $0x44] sm:$0xf]
  %v224 = vld [vmem:[%s6 + $0x48] sm:$0xff]
  %v225 = vld [vmem:[%s6 + $0x50] sm:$0xf]
  %v226 = vld [vmem:[%s6 + $0x54] sm:$0xff]
  %v227 = vld [vmem:[%s6 + $0x5c] sm:$0xf]
  %v228 = vld [vmem:[%s6 + $0x60] sm:$0xff]
  %v229 = vld [vmem:[%s6 + $0x68] sm:$0xf]
  %v230 = vld [vmem:[%s6 + $0x6c] sm:$0xff]
  %v231 = vld [vmem:[%s6 + $0x74] sm:$0xf]
  %v232 = vld [vmem:[%s6 + $0x78] sm:$0xff]
  %v233 = vld [vmem:[%s6 + $0x80] sm:$0xf]
  %v234 = vld [vmem:[%s6 + $0x84] sm:$0xff]
  %v235 = vld [vmem:[%s6 + $0x8c] sm:$0xf]
  %v236 = vld [vmem:[%s6 + $0x90] sm:$0xff]
  %v237 = vld [vmem:[%s6 + $0x98] sm:$0xf]
  %v238 = vld [vmem:[%s6 + $0x9c] sm:$0xff]
  %v239 = vld [vmem:[%s6 + $0xa4] sm:$0xf]
  %v240 = vld [vmem:[%s6 + $0xa8] sm:$0xff]
  %v241 = vld [vmem:[%s6 + $0xb0] sm:$0xf]
  %v242 = vld [vmem:[%s6 + $0xb4] sm:$0xff]
  %v243 = vld [vmem:[%s6 + $0xbc] sm:$0xf]
  %v276 = vunpack.c.l.b16 %v212
  %v277 = vunpack.c.h.b16 %v212
  %v278 = vunpack.c.l.b16 %v213
  %v279 = vunpack.c.l.b16 %v214
  %v280 = vunpack.c.h.b16 %v214
  %v281 = vunpack.c.l.b16 %v215
  %v282 = vunpack.c.l.b16 %v216
  %v283 = vunpack.c.h.b16 %v216
  %v284 = vunpack.c.l.b16 %v217
  %v285 = vunpack.c.l.b16 %v218
  %v286 = vunpack.c.h.b16 %v218
  %v287 = vunpack.c.l.b16 %v219
  %v288 = vunpack.c.l.b16 %v220
  %v289 = vunpack.c.h.b16 %v220
  %v290 = vunpack.c.l.b16 %v221
  %v291 = vunpack.c.l.b16 %v222
  %v292 = vunpack.c.h.b16 %v222
  %v293 = vunpack.c.l.b16 %v223
  %v294 = vunpack.c.l.b16 %v224
  %v295 = vunpack.c.h.b16 %v224
  %v296 = vunpack.c.l.b16 %v225
  %v297 = vunpack.c.l.b16 %v226
  %v298 = vunpack.c.h.b16 %v226
  %v299 = vunpack.c.l.b16 %v227
  %v300 = vunpack.c.l.b16 %v228
  %v301 = vunpack.c.h.b16 %v228
  %v302 = vunpack.c.l.b16 %v229
  %v303 = vunpack.c.l.b16 %v230
  %v304 = vunpack.c.h.b16 %v230
  %v305 = vunpack.c.l.b16 %v231
  %v306 = vunpack.c.l.b16 %v232
  %v307 = vunpack.c.h.b16 %v232
  %v308 = vunpack.c.l.b16 %v233
  %v309 = vunpack.c.l.b16 %v234
  %v310 = vunpack.c.h.b16 %v234
  %v311 = vunpack.c.l.b16 %v235
  %v312 = vunpack.c.l.b16 %v236
  %v313 = vunpack.c.h.b16 %v236
  %v314 = vunpack.c.l.b16 %v237
  %v315 = vunpack.c.l.b16 %v238
  %v316 = vunpack.c.h.b16 %v238
  %v317 = vunpack.c.l.b16 %v239
  %v318 = vunpack.c.l.b16 %v240
  %v319 = vunpack.c.h.b16 %v240
  %v320 = vunpack.c.l.b16 %v241
  %v321 = vunpack.c.l.b16 %v242
  %v322 = vunpack.c.h.b16 %v242
  %v323 = vunpack.c.l.b16 %v243
  %v324 = vpack.c.b16 %v279, %v276
  %v325 = vpack.c.b16 %v280, %v277
  %v326 = vpack.c.b16 %v281, %v278
  %v327 = vpack.c.b16 %v285, %v282
  %v328 = vpack.c.b16 %v286, %v283
  %v329 = vpack.c.b16 %v287, %v284
  %v330 = vpack.c.b16 %v291, %v288
  %v331 = vpack.c.b16 %v292, %v289
  %v332 = vpack.c.b16 %v293, %v290
  %v333 = vpack.c.b16 %v297, %v294
  %v334 = vpack.c.b16 %v298, %v295
  %v335 = vpack.c.b16 %v299, %v296
  %v336 = vpack.c.b16 %v303, %v300
  %v337 = vpack.c.b16 %v304, %v301
  %v338 = vpack.c.b16 %v305, %v302
  %v339 = vpack.c.b16 %v309, %v306
  %v340 = vpack.c.b16 %v310, %v307
  %v341 = vpack.c.b16 %v311, %v308
  %v342 = vpack.c.b16 %v315, %v312
  %v343 = vpack.c.b16 %v316, %v313
  %v344 = vpack.c.b16 %v317, %v314
  %v345 = vpack.c.b16 %v321, %v318
  %v346 = vpack.c.b16 %v322, %v319
  %v347 = vpack.c.b16 %v323, %v320
  %372 = vmatpush.bf16.msra.mxu0 %v345
  %373 = vmatpush.bf16.msra.mxu0 %v342
  %374 = vmatpush.bf16.msra.mxu0 %v339
  %375 = vmatpush.bf16.msra.mxu0 %v336
  %376 = vmatpush.bf16.msra.mxu0 %v333
  %377 = vmatpush.bf16.msra.mxu0 %v330
  %378 = vmatpush.bf16.msra.mxu0 %v327
  %379 = vmatpush.bf16.msra.mxu0 %v324
  %380 = vmatmul.bf16.gmra.mxu0 %v211
  %v381 = vpop.f32.mrf.mxu0
  %v382 = vadd.f32 0.0, %v381
  %v383 = vpop.f32.mrf.mxu0
  %384 = vdwg.mxu0
  %385 = vmatpush.bf16.msra.mxu0 %v346
  %386 = vmatpush.bf16.msra.mxu0 %v343
  %387 = vmatpush.bf16.msra.mxu0 %v340
  %388 = vmatpush.bf16.msra.mxu0 %v337
  %389 = vmatpush.bf16.msra.mxu0 %v334
  %390 = vmatpush.bf16.msra.mxu0 %v331
  %391 = vmatpush.bf16.msra.mxu0 %v328
  %392 = vmatpush.bf16.msra.mxu0 %v325
  %393 = vmatmul.bf16.gmra.mxu0 %v211
  %v394 = vpop.f32.mrf.mxu0
  %v395 = vadd.f32 0.0, %v394
  %v396 = vpop.f32.mrf.mxu0
  %397 = vdwg.mxu0
  %398 = vmatpush.bf16.msra.mxu0 %v347
  %399 = vmatpush.bf16.msra.mxu0 %v344
  %400 = vmatpush.bf16.msra.mxu0 %v341
  %401 = vmatpush.bf16.msra.mxu0 %v338
  %402 = vmatpush.bf16.msra.mxu0 %v335
  %403 = vmatpush.bf16.msra.mxu0 %v332
  %404 = vmatpush.bf16.msra.mxu0 %v329
  %405 = vmatpush.bf16.msra.mxu0 %v326
  %406 = vmatmul.bf16.gmra.mxu0 %v211
  %v407 = vpop.f32.mrf.mxu0
  %v408 = vadd.f32 0.0, %v407
  %v409 = vpop.f32.mrf.mxu0
  %410 = vdwg.mxu0
  %v411 = vadd.f32 %v161, %v382
  %v412 = vadd.f32 %v174, %v395
  %v413 = vadd.f32 %v187, %v408
  %v414 = vxor.u32 %v411, 2147483648
  %v415 = vmul.f32 %v414, 1.442695
  %v416 = vpow.pop %v415
  %v417 = vadd.f32 %v416, 1.0
  %v418 = vrcp.pop %v417
  %v419 = vmul.f32 %v417, %v418
  %v420 = vsub.f32 1.0, %v419
  %v421 = vmul.f32 %v418, %v420
  %v422 = vadd.f32 %v418, %v421
  %vm423 = vweird.f32 %v417
  %vm424 = vweird.f32 %v418
  %vm425 = vmor %vm423, %vm424
  %v426 = vsel %vm425, %v418, %v422
  %v427 = vand.u32 2147483647, %v417
  %vm428 = vcmp.eq.f32.partialorder %v427, 8.507059e+37
  %v429 = vand.u32 %v417, 2147483648
  %v430 = vor.u32 1.1754944e-38, %v429
  %v431 = vsel %vm428, %v430, %v426
  %v432 = vmul.f32 1.0, %v431
  %v433 = vxor.u32 %v412, 2147483648
  %v434 = vmul.f32 %v433, 1.442695
  %v435 = vpow.pop %v434
  %v436 = vadd.f32 %v435, 1.0
  %v437 = vrcp.pop %v436
  %v438 = vmul.f32 %v436, %v437
  %v439 = vsub.f32 1.0, %v438
  %v440 = vmul.f32 %v437, %v439
  %v441 = vadd.f32 %v437, %v440
  %vm442 = vweird.f32 %v436
  %vm443 = vweird.f32 %v437
  %vm444 = vmor %vm442, %vm443
  %v445 = vsel %vm444, %v437, %v441
  %v446 = vand.u32 2147483647, %v436
  %vm447 = vcmp.eq.f32.partialorder %v446, 8.507059e+37
  %v448 = vand.u32 %v436, 2147483648
  %v449 = vor.u32 1.1754944e-38, %v448
  %v450 = vsel %vm447, %v449, %v445
  %v451 = vmul.f32 1.0, %v450
  %v452 = vtanh.pop %v413
  %v453 = vld [vmem:[%s7] sm:$0xf]
  %v454 = vld [vmem:[%s7 + $0x4] sm:$0xf]
  %v455 = vld [vmem:[%s7 + $0x8] sm:$0xf]
  %v456 = vld [vmem:[%s7 + $0xc] sm:$0xf]
  %v457 = vld [vmem:[%s7 + $0x10] sm:$0xf]
  %v458 = vld [vmem:[%s7 + $0x14] sm:$0xf]
  %v459 = vld [vmem:[%s7 + $0x18] sm:$0xf]
  %v460 = vld [vmem:[%s7 + $0x1c] sm:$0xf]
  %v461 = vld [vmem:[%s7 + $0x20] sm:$0xf]
  %v462 = vld [vmem:[%s7 + $0x24] sm:$0xf]
  %v463 = vld [vmem:[%s7 + $0x28] sm:$0xf]
  %v464 = vld [vmem:[%s7 + $0x2c] sm:$0xf]
  %v465 = vld [vmem:[%s7 + $0x30] sm:$0xf]
  %v466 = vld [vmem:[%s7 + $0x34] sm:$0xf]
  %v467 = vld [vmem:[%s7 + $0x38] sm:$0xf]
  %v468 = vld [vmem:[%s7 + $0x3c] sm:$0xf]
  %v469 = vpack.c.bf16 %v37, %v37
  %v486 = vunpack.c.l.b16 %v453
  %v487 = vunpack.c.l.b16 %v454
  %v488 = vunpack.c.l.b16 %v455
  %v489 = vunpack.c.l.b16 %v456
  %v490 = vunpack.c.l.b16 %v457
  %v491 = vunpack.c.l.b16 %v458
  %v492 = vunpack.c.l.b16 %v459
  %v493 = vunpack.c.l.b16 %v460
  %v494 = vunpack.c.l.b16 %v461
  %v495 = vunpack.c.l.b16 %v462
  %v496 = vunpack.c.l.b16 %v463
  %v497 = vunpack.c.l.b16 %v464
  %v498 = vunpack.c.l.b16 %v465
  %v499 = vunpack.c.l.b16 %v466
  %v500 = vunpack.c.l.b16 %v467
  %v501 = vunpack.c.l.b16 %v468
  %v502 = vpack.c.b16 %v487, %v486
  %v503 = vpack.c.b16 %v489, %v488
  %v504 = vpack.c.b16 %v491, %v490
  %v505 = vpack.c.b16 %v493, %v492
  %v506 = vpack.c.b16 %v495, %v494
  %v507 = vpack.c.b16 %v497, %v496
  %v508 = vpack.c.b16 %v499, %v498
  %v509 = vpack.c.b16 %v501, %v500
  %518 = vmatpush.bf16.msra.mxu0 %v509
  %519 = vmatpush.bf16.msra.mxu0 %v508
  %520 = vmatpush.bf16.msra.mxu0 %v507
  %521 = vmatpush.bf16.msra.mxu0 %v506
  %522 = vmatpush.bf16.msra.mxu0 %v505
  %523 = vmatpush.bf16.msra.mxu0 %v504
  %524 = vmatpush.bf16.msra.mxu0 %v503
  %525 = vmatpush.bf16.msra.mxu0 %v502
  %526 = vmatmul.bf16.gmra.mxu0 %v469
  %v527 = vpop.f32.mrf.mxu0
  %v528 = vadd.f32 %v200, %v527
  %v529 = vpop.f32.mrf.mxu0
  %530 = vdwg.mxu0
  %v531 = vxor.u32 %v528, 2147483648
  %v532 = vmul.f32 %v531, 1.442695
  %v533 = vpow.pop %v532
  %v534 = vadd.f32 %v533, 1.0
  %v535 = vrcp.pop %v534
  %v536 = vmul.f32 %v534, %v535
  %v537 = vsub.f32 1.0, %v536
  %v538 = vmul.f32 %v535, %v537
  %v539 = vadd.f32 %v535, %v538
  %vm540 = vweird.f32 %v534
  %vm541 = vweird.f32 %v535
  %vm542 = vmor %vm540, %vm541
  %v543 = vsel %vm542, %v535, %v539
  %v544 = vand.u32 2147483647, %v534
  %vm545 = vcmp.eq.f32.partialorder %v544, 8.507059e+37
  %v546 = vand.u32 %v534, 2147483648
  %v547 = vor.u32 1.1754944e-38, %v546
  %v548 = vsel %vm545, %v547, %v543
  %v549 = vmul.f32 1.0, %v548
  %v550 = vmul.f32 %v549, %v34
  %v551 = vadd.f32 %v550, 0.0
  %v552 = vpack.c.bf16 %v38, %v38
  %553 = vmatpush.bf16.msra.mxu0 %v509
  %554 = vmatpush.bf16.msra.mxu0 %v508
  %555 = vmatpush.bf16.msra.mxu0 %v507
  %556 = vmatpush.bf16.msra.mxu0 %v506
  %557 = vmatpush.bf16.msra.mxu0 %v505
  %558 = vmatpush.bf16.msra.mxu0 %v504
  %559 = vmatpush.bf16.msra.mxu0 %v503
  %560 = vmatpush.bf16.msra.mxu0 %v502
  %561 = vmatmul.bf16.gmra.mxu0 %v552
  %v562 = vpop.f32.mrf.mxu0
  %v563 = vadd.f32 %v200, %v562
  %v564 = vpop.f32.mrf.mxu0
  %565 = vdwg.mxu0
  %v566 = vxor.u32 %v563, 2147483648
  %v567 = vmul.f32 %v566, 1.442695
  %v568 = vpow.pop %v567
  %v569 = vadd.f32 %v568, 1.0
  %v570 = vrcp.pop %v569
  %v571 = vmul.f32 %v569, %v570
  %v572 = vsub.f32 1.0, %v571
  %v573 = vmul.f32 %v570, %v572
  %v574 = vadd.f32 %v570, %v573
  %vm575 = vweird.f32 %v569
  %vm576 = vweird.f32 %v570
  %vm577 = vmor %vm575, %vm576
  %v578 = vsel %vm577, %v570, %v574
  %v579 = vand.u32 2147483647, %v569
  %vm580 = vcmp.eq.f32.partialorder %v579, 8.507059e+37
  %v581 = vand.u32 %v569, 2147483648
  %v582 = vor.u32 1.1754944e-38, %v581
  %v583 = vsel %vm580, %v582, %v578
  %v584 = vmul.f32 1.0, %v583
  %v585 = vmul.f32 %v584, %v35
  %v586 = vadd.f32 %v551, %v585
  %v587 = vpack.c.bf16 %v39, %v39
  %588 = vmatpush.bf16.msra.mxu0 %v509
  %589 = vmatpush.bf16.msra.mxu0 %v508
  %590 = vmatpush.bf16.msra.mxu0 %v507
  %591 = vmatpush.bf16.msra.mxu0 %v506
  %592 = vmatpush.bf16.msra.mxu0 %v505
  %593 = vmatpush.bf16.msra.mxu0 %v504
  %594 = vmatpush.bf16.msra.mxu0 %v503
  %595 = vmatpush.bf16.msra.mxu0 %v502
  %596 = vmatmul.bf16.gmra.mxu0 %v587
  %v597 = vpop.f32.mrf.mxu0
  %v598 = vadd.f32 %v200, %v597
  %v599 = vpop.f32.mrf.mxu0
  %600 = vdwg.mxu0
  %v601 = vxor.u32 %v598, 2147483648
  %v602 = vmul.f32 %v601, 1.442695
  %v603 = vpow.pop %v602
  %v604 = vadd.f32 %v603, 1.0
  %v605 = vrcp.pop %v604
  %v606 = vmul.f32 %v604, %v605
  %v607 = vsub.f32 1.0, %v606
  %v608 = vmul.f32 %v605, %v607
  %v609 = vadd.f32 %v605, %v608
  %vm610 = vweird.f32 %v604
  %vm611 = vweird.f32 %v605
  %vm612 = vmor %vm610, %vm611
  %v613 = vsel %vm612, %v605, %v609
  %v614 = vand.u32 2147483647, %v604
  %vm615 = vcmp.eq.f32.partialorder %v614, 8.507059e+37
  %v616 = vand.u32 %v604, 2147483648
  %v617 = vor.u32 1.1754944e-38, %v616
  %v618 = vsel %vm615, %v617, %v613
  %v619 = vmul.f32 1.0, %v618
  %v620 = vmul.f32 %v619, %v36
  %v621 = vadd.f32 %v586, %v620
  %v622 = vmul.f32 %v432, %v452
  %v623 = vadd.f32 %v622, %v621
  %v624 = vtanh.pop %v623
  %v625 = vmul.f32 %v451, %v624
  %626 = vst [vmem:[%s8] sm:$0xff] %v623
  %627 = vst [vmem:[%s9] sm:$0xff] %v625
  // Predicated region
  $region34: #{_level_step.1} parent=0 // pred_check
    _
  $region35: #{_level_step.1} parent=0 // pred_check_branch
    %629 = sbr.rel (0) target = $region37
  $region36: #{_level_step.1} parent=0 // pred_region
    _
  $region37: #{_level_step.1} parent=0 // pred_fallthru
    _
  // Predicated region
  $region38: #{_level_step.1} parent=0 // pred_check
    _
  $region39: #{_level_step.1} parent=0 // pred_check_branch
    %631 = sbr.rel (0) target = $region41
  $region40: #{_level_step.1} parent=0 // pred_region
    _
  $region41: #{_level_step.1} parent=0 // pred_fallthru
    _
  // Predicated region
  $region42: #{_level_step.1} parent=0 // pred_check
    _
  $region43: #{_level_step.1} parent=0 // pred_check_branch
    %633 = sbr.rel (0) target = $region45
  $region44: #{_level_step.1} parent=0 // pred_region
    _
  $region45: #{_level_step.1} parent=0 // pred_fallthru
    _
  // Predicated region
  $region46: #{_level_step.1} parent=0 // pred_check
    _
  $region47: #{_level_step.1} parent=0 // pred_check_branch
    %635 = sbr.rel (0) target = $region49
  $region48: #{_level_step.1} parent=0 // pred_region
    _
  $region49: #{_level_step.1} parent=0 // pred_fallthru
    _

</llo_original>
